<compile_context>
chip_gen: v5e
topology: v5e:2x2
jax: 0.10.0
libtpu: 0.0.40
codegen_flags: <defaults>
</compile_context>

<pallas_src>
import jax
import jax.numpy as jnp
from jax.experimental import pallas as pl
from jax.experimental.pallas import tpu as pltpu


def _swish_kernel(x_ref, o_ref):
    x = x_ref[...]
    # swish(x) = x * sigmoid(x); computed in f32 for accuracy, cast back.
    xf = x.astype(jnp.float32)
    o_ref[...] = (xf * jax.nn.sigmoid(xf)).astype(o_ref.dtype)


def _pick_lane_width(n: int) -> int:
    """Pick a lane-dense last dim (multiple of 128).

    Prefer wide widths that evenly divide n (so no padding copy is needed)
    and give at least 8 rows; otherwise fall back to 128 with a tiny tail pad.
    """
    candidates = (2048, 1024, 512, 256, 128)
    for w in candidates:
        if n % w == 0 and n // w >= 8:
            return w
    for w in candidates:
        if n % w == 0:
            return w
    return 128


def swish(x: jax.Array, *, target_block_bytes: int = 2 * 1024 * 1024) -> jax.Array:
    """Elementwise Swish matching torch: x * torch.sigmoid(x).

    The PyTorch module mutates `x` in-place when inplace=True; JAX is
    functional, so we return a new array with identical values (the
    pallas_call aliases its input buffer to the output so XLA may reuse it).
    """
    orig_shape = x.shape
    orig_dtype = x.dtype
    n = x.size

    lanes = _pick_lane_width(n)
    x_flat = jnp.reshape(x, (-1,))
    n_pad = (-n) % lanes
    if n_pad:
        # Only hit when n is not a multiple of 128; pads at most 127 elements.
        x_flat = jnp.pad(x_flat, (0, n_pad))
    rows = x_flat.size // lanes
    x2d = jnp.reshape(x_flat, (rows, lanes))

    # Dtype-aware sublane packing: 8 rows/vreg for 4-byte, 16 for 2-byte,
    # 32 for 1-byte dtypes.
    itemsize = jnp.dtype(orig_dtype).itemsize
    packing = max(8, 32 // max(1, itemsize))

    # Aim for ~2 MiB blocks: with double-buffered input + output that is
    # ~8 MiB of VMEM, safe on v5e / v6e / v7x, while amortizing the ~0.35 us
    # per-grid-step overhead of this purely memory-bound kernel.
    tile_rows = (target_block_bytes // (lanes * itemsize)) // packing * packing
    tile_rows = max(packing, tile_rows)
    rows_aligned = ((rows + packing - 1) // packing) * packing
    tile_rows = min(tile_rows, rows_aligned)

    grid = (pl.cdiv(rows, tile_rows),)  # ragged last block is masked by Pallas

    out2d = pl.pallas_call(
        _swish_kernel,
        out_shape=jax.ShapeDtypeStruct((rows, lanes), orig_dtype),
        grid_spec=pltpu.PrefetchScalarGridSpec(
            num_scalar_prefetch=0,
            grid=grid,
            in_specs=[pl.BlockSpec((tile_rows, lanes), lambda i: (i, 0))],
            out_specs=pl.BlockSpec((tile_rows, lanes), lambda i: (i, 0)),
        ),
        compiler_params=pltpu.CompilerParams(
            dimension_semantics=("parallel",),
            vmem_limit_bytes=32 * 1024 * 1024,
        ),
        # Mirror the PyTorch inplace=True semantics: let XLA reuse x's buffer.
        input_output_aliases={0: 0},
    )(x2d)

    out_flat = jnp.reshape(out2d, (-1,))
    if n_pad:
        out_flat = out_flat[:n]
    return jnp.reshape(out_flat, orig_shape)


if __name__ == "__main__":
    key = jax.random.PRNGKey(0)
    # Small NCHW input consistent with how Swish is used in a conv/FC net.
    x = jax.random.normal(key, (2, 4, 16, 16), dtype=jnp.float32)

    # Reference computed first in plain JAX (kernel output is buffer-aliased).
    y_ref = x * jax.nn.sigmoid(x)

    y = swish(x)
    y = jax.block_until_ready(y)

    assert y.shape == x.shape and y.dtype == x.dtype
    assert jnp.max(jnp.abs(y - y_ref)) < 1e-6

    print("KERNEL_OK")
</pallas_src>

<mosaic_0001>
module attributes {stable_mosaic.version = 11 : i64} {
  func.func @_swish_kernel(%arg0: i32, %arg1: memref<8x256xf32, #tpu.memory_space<vmem>>, %arg2: memref<8x256xf32, #tpu.memory_space<vmem>>) attributes {dimension_semantics = [#tpu.dimension_semantics<parallel>], iteration_bounds = array<i64: 1>, scalar_prefetch = 0 : i64, scratch_operands = 0 : i64, tpu.core_type = #tpu.core_type<tc>, window_params = [{transform_indices = @transform_0, window_bounds = array<i64: 8, 256>}, {transform_indices = @transform_1, window_bounds = array<i64: 8, 256>}]} {
    %c0 = arith.constant 0 : index
    %c0_0 = arith.constant 0 : index
    %0 = vector.load %arg1[%c0, %c0_0] : memref<8x256xf32, #tpu.memory_space<vmem>>, vector<8x256xf32>
    %1 = arith.negf %0 : vector<8x256xf32>
    %2 = math.exp %1 : vector<8x256xf32>
    %cst = arith.constant 1.000000e+00 : f32
    %3 = vector.broadcast %cst : f32 to vector<8x256xf32>
    %4 = arith.addf %3, %2 : vector<8x256xf32>
    %5 = arith.divf %3, %4 : vector<8x256xf32>
    %6 = arith.mulf %0, %5 : vector<8x256xf32>
    %c0_1 = arith.constant 0 : index
    %c0_2 = arith.constant 0 : index
    %7 = vector.load %arg2[%c0_1, %c0_2] : memref<8x256xf32, #tpu.memory_space<vmem>>, vector<8x256xf32>
    tpu.vector_store %arg2[%c0_1, %c0_2], %6 {strides = array<i32>} : memref<8x256xf32, #tpu.memory_space<vmem>>, vector<8x256xf32>,
    return
  }
  func.func @transform_0(%arg0: i32) -> (i32, i32) {
    %c0_i32 = arith.constant 0 : i32
    %c0_i32_0 = arith.constant 0 : i32
    return %arg0, %c0_i32 : i32, i32
  }
  func.func @transform_1(%arg0: i32) -> (i32, i32) {
    %c0_i32 = arith.constant 0 : i32
    %c0_i32_0 = arith.constant 0 : i32
    return %arg0, %c0_i32 : i32, i32
  }
}

</mosaic_0001>

<llo_original>
// kernel: tpu_custom_call.1
$region0: #{tpu_custom_call.1}
  #allocation0 [shape = 'u32[]', space=smem, size = 0x4, offset = 0x4, fixed_abs, tag = 'smem constant byte address 0x4 - core index']
  #allocation1 [shape = 'u32[72,128]{1,0:T(1,128)}', space=vmem, size = 0x9000, scoped, tag = 'internal scratch']
  %s0 = inlined_call_operand.hbm [shape: f32[8,256], index: 0, kind: input, shape index: {}, may-alias: {0,1}]
  %s1 = inlined_call_operand.hbm [shape: f32[8,256], index: 1, kind: output, shape index: {}, may-alias: {0,1}]
  %s2 = sld [smem:[#allocation0]]
  $region18: #{tpu_custom_call.1} parent=0
    _
  %s4 = ssub.s32 1, %s2
  %s5 = scalar_select 0, %s4, %s2
  $region1: #{tpu_custom_call.1} parent=0
    #allocation2 [shape = 'u8[8192]{0}', space=vmem, size = 0x2000, scoped, tag = 'input window, operand 0, single buffered']
    #allocation3 [shape = 's32[1]{0}', space=sflag, size = 0x4, scoped, tag = 'scoped memory for tpu_custom_call.1']
    #allocation4 [shape = 's32[1]{0}', space=sflag, size = 0x4, scoped, tag = 'scoped memory for tpu_custom_call.1']
    #allocation5 [shape = 'u8[8192]{0}', space=vmem, size = 0x2000, scoped, tag = 'output window, operand 0, single buffered']
    %6 = vsyncpa [#allocation3], 0
    %7 = vsyncpa [#allocation4], 0
    // Predicated region
    $region2: #{tpu_custom_call.1} parent=1 // pred_check
      _
    $region3: #{tpu_custom_call.1} parent=1 // pred_check_branch
      %9 = sbr.rel (0) target = $region5
    $region4: #{tpu_custom_call.1} parent=1 // pred_region
      %11 = vsyncadd [#allocation3], 0
      %s13 = sshll.u32 %s0, 4
      %s14 = int_to_ptr.hbm [resolvable:$true] %s13
      %s15 = sshll.u32 [#allocation2], 4
      %s16 = int_to_ptr.vmem [resolvable:$true] %s15
      %18 = dma.hbm_to_vmem [thread:$0]  %s14, 256, %s16, [#allocation3]
    $region5: #{tpu_custom_call.1} parent=1 // pred_fallthru
      _
    // Predicated region
    $region6: #{tpu_custom_call.1} parent=1 // pred_check
      _
    $region7: #{tpu_custom_call.1} parent=1 // pred_check_branch
      %20 = sbr.rel (0) target = $region9
    $region8: #{tpu_custom_call.1} parent=1 // pred_region
      %22 = dma.done [#allocation3], 256
    $region9: #{tpu_custom_call.1} parent=1 // pred_fallthru
      _
    %v23 = vld [vmem:[#allocation2] sm:$0xff]
    %v24 = vld [vmem:[#allocation2 + $0x8] sm:$0xff]
    %v25 = vxor.u32 %v23, 2147483648
    %v26 = vxor.u32 %v24, 2147483648
    %v27 = vmul.f32 %v25, 1.442695
    %v28 = vpow.pop %v27
    %v29 = vmul.f32 %v26, 1.442695
    %v30 = vpow.pop %v29
    %v31 = vadd.f32 %v28, 1.0
    %v32 = vadd.f32 %v30, 1.0
    %v33 = vrcp.pop %v31
    %v34 = vmul.f32 %v31, %v33
    %v35 = vsub.f32 1.0, %v34
    %v36 = vmul.f32 %v33, %v35
    %v37 = vadd.f32 %v33, %v36
    %vm38 = vweird.f32 %v31
    %vm39 = vweird.f32 %v33
    %vm40 = vmor %vm38, %vm39
    %v41 = vsel %vm40, %v33, %v37
    %v42 = vand.u32 2147483647, %v31
    %vm43 = vcmp.eq.f32.partialorder %v42, 8.507059e+37
    %v44 = vand.u32 %v31, 2147483648
    %v45 = vor.u32 1.1754944e-38, %v44
    %v46 = vsel %vm43, %v45, %v41
    %v47 = vmul.f32 1.0, %v46
    %v48 = vrcp.pop %v32
    %v49 = vmul.f32 %v32, %v48
    %v50 = vsub.f32 1.0, %v49
    %v51 = vmul.f32 %v48, %v50
    %v52 = vadd.f32 %v48, %v51
    %vm53 = vweird.f32 %v32
    %vm54 = vweird.f32 %v48
    %vm55 = vmor %vm53, %vm54
    %v56 = vsel %vm55, %v48, %v52
    %v57 = vand.u32 2147483647, %v32
    %vm58 = vcmp.eq.f32.partialorder %v57, 8.507059e+37
    %v59 = vand.u32 %v32, 2147483648
    %v60 = vor.u32 1.1754944e-38, %v59
    %v61 = vsel %vm58, %v60, %v56
    %v62 = vmul.f32 1.0, %v61
    %v63 = vmul.f32 %v23, %v47
    %v64 = vmul.f32 %v24, %v62
    %65 = vst [vmem:[#allocation5] sm:$0xff] %v63
    %66 = vst [vmem:[#allocation5 + $0x8] sm:$0xff] %v64
    // Predicated region
    $region10: #{tpu_custom_call.1} parent=1 // pred_check
      _
    $region11: #{tpu_custom_call.1} parent=1 // pred_check_branch
      %68 = sbr.rel (0) target = $region13
    $region12: #{tpu_custom_call.1} parent=1 // pred_region
      %70 = vsyncadd [#allocation4], 0
      %s72 = sshll.u32 [#allocation5], 4
      %s73 = int_to_ptr.vmem [resolvable:$true] %s72
      %s74 = sshll.u32 %s1, 4
      %s75 = int_to_ptr.hbm [resolvable:$true] %s74
      %77 = dma.vmem_to_hbm [thread:$0]  %s73, 256, %s75, [#allocation4]
    $region13: #{tpu_custom_call.1} parent=1 // pred_fallthru
      _
    // Predicated region
    $region14: #{tpu_custom_call.1} parent=1 // pred_check
      _
    $region15: #{tpu_custom_call.1} parent=1 // pred_check_branch
      %79 = sbr.rel (0) target = $region17
    $region16: #{tpu_custom_call.1} parent=1 // pred_region
      %81 = dma.done [#allocation4], 256
    $region17: #{tpu_custom_call.1} parent=1 // pred_fallthru
      _
    %82 = vsyncpa [#allocation3], 1
    %83 = vsyncpa [#allocation4], 1

</llo_original>
